<compile_context>
chip_gen: v7x
topology: tpu7x:2x2x1
jax: 0.10.0
libtpu: 0.0.40
codegen_flags: <defaults>
</compile_context>

<pallas_src>
import functools

import jax
import jax.numpy as jnp
from jax.experimental import pallas as pl
from jax.experimental.pallas import tpu as pltpu


def _round_up(x, m):
    return ((x + m - 1) // m) * m


def _mlp_kernel(xT_ref,
                w1_ref, b1_ref,
                w2_ref, b2_ref,
                w3_ref, b3_ref,
                w4_ref, b4_ref,
                oT_ref,
                *, compute_dtype):
    """Fused transposed MLP on one (features, batch_tile) tile.

    Computes o_T = W4 @ tanh(W3 @ tanh(W2 @ tanh(W1 @ x_T + b1) + b2) + b3) + b4
    with f32 MXU accumulation; matmul operands are `compute_dtype`.
    """
    xT = xT_ref[...]                                                  # (in, bt)

    def layer(h, w_ref, b_ref):
        # MXU matmul, f32 accumulation; bias add stays f32.
        acc = jnp.dot(w_ref[...], h, preferred_element_type=jnp.float32)
        return acc + b_ref[...]                                       # (out_f, bt)

    # tanh is evaluated in f32 (safe on v5e where bf16 VPU/EUP is absent);
    # only the next matmul's operand is cast back to compute_dtype.
    h = jnp.tanh(layer(xT, w1_ref, b1_ref)).astype(compute_dtype)
    h = jnp.tanh(layer(h, w2_ref, b2_ref)).astype(compute_dtype)
    h = jnp.tanh(layer(h, w3_ref, b3_ref)).astype(compute_dtype)
    out = layer(h, w4_ref, b4_ref)                                    # f32

    oT_ref[...] = out.astype(oT_ref.dtype)


@functools.partial(jax.jit, static_argnames=("batch_tile", "compute_dtype"))
def mlp_unit_forward(x, params, *, batch_tile=256, compute_dtype=jnp.float32):
    """Run the fused MLP kernel.

    x: (B, input_size) float32.
    params: ((W1, b1), ..., (W4, b4)) with W_i of shape (out_f, in_f) (nn.Linear
            layout) and b_i of shape (out_f,).
    batch_tile: rows per grid step.  Rounded up to a multiple of 128 when
            B > batch_tile so tiles stay MXU/lane aligned.
    compute_dtype: dtype of the matmul operands (use jnp.bfloat16 on v6e/v7x);
            accumulation, bias add and tanh remain float32.
    """
    (w1, b1), (w2, b2), (w3, b3), (w4, b4) = params
    B, in_size = x.shape
    out_size = w4.shape[0]
    out_dtype = x.dtype

    # ---- batch tiling: lane-dense tiles, padded batch -----------------------
    if B > batch_tile:
        bt = _round_up(batch_tile, 128)        # multiple of 128 → unmasked lanes
    else:
        bt = _round_up(B, 8)                   # single tile == full (padded) dim
    B_pad = _round_up(B, bt)
    n_tiles = B_pad // bt

    if B_pad != B:
        x = jnp.pad(x, ((0, B_pad - B), (0, 0)))

    # Transposed layout: batch on the last (lane) axis.
    xT = x.T.astype(compute_dtype)             # (in_size, B_pad)

    def prep(w, b):
        return w.astype(compute_dtype), b.reshape(-1, 1).astype(jnp.float32)

    w1, b1 = prep(w1, b1)
    w2, b2 = prep(w2, b2)
    w3, b3 = prep(w3, b3)
    w4, b4 = prep(w4, b4)

    def full_spec(arr):
        n = arr.ndim
        return pl.BlockSpec(arr.shape, lambda i, n=n: (0,) * n)

    grid_spec = pltpu.PrefetchScalarGridSpec(
        num_scalar_prefetch=0,
        grid=(n_tiles,),
        in_specs=[
            pl.BlockSpec((in_size, bt), lambda i: (0, i)),   # x_T batch tile
            full_spec(w1), full_spec(b1),
            full_spec(w2), full_spec(b2),
            full_spec(w3), full_spec(b3),
            full_spec(w4), full_spec(b4),
        ],
        out_specs=pl.BlockSpec((out_size, bt), lambda i: (0, i)),
    )

    kernel = functools.partial(_mlp_kernel, compute_dtype=compute_dtype)

    outT = pl.pallas_call(
        kernel,
        out_shape=jax.ShapeDtypeStruct((out_size, B_pad), out_dtype),
        grid_spec=grid_spec,
        compiler_params=pltpu.CompilerParams(
            dimension_semantics=("parallel",),   # independent batch tiles →
        ),                                       # megacore-shardable on v7x
    )(xT, w1, b1, w2, b2, w3, b3, w4, b4)

    return outT.T[:B]                            # back to (B, out_size)


# ------------------------------ test helpers --------------------------------
def init_mlp_params(key, dims):
    """nn.Linear-style params. dims = [in, h1, h2, h3, out]."""
    params = []
    for i in range(len(dims) - 1):
        key, kw, kb = jax.random.split(key, 3)
        fan_in = dims[i]
        bound = 1.0 / (fan_in ** 0.5)
        w = jax.random.uniform(kw, (dims[i + 1], dims[i]),
                               minval=-bound, maxval=bound, dtype=jnp.float32)
        b = jax.random.uniform(kb, (dims[i + 1],),
                               minval=-bound, maxval=bound, dtype=jnp.float32)
        params.append((w, b))
    return params


def mlp_reference(x, params):
    h = x
    for i, (w, b) in enumerate(params):
        h = h @ w.T + b
        if i < len(params) - 1:
            h = jnp.tanh(h)
    return h


if __name__ == "__main__":
    key = jax.random.PRNGKey(0)

    # config-implied sizes:
    #   input_size = common.history_seq_len = 32
    #   layer1/layer2/layer3 hidden_num     = 64 / 48 / 32
    #   output_num = aemlp.encode_size      = 16
    input_size, h1, h2, h3, out_size = 32, 64, 48, 32, 16

    key, kx, kp = jax.random.split(key, 3)
    params = init_mlp_params(kp, [input_size, h1, h2, h3, out_size])

    # Small batch: single full-extent tile.
    x_small = jax.random.normal(kx, (16, input_size), dtype=jnp.float32)
    y_small = jax.block_until_ready(mlp_unit_forward(x_small, params))
    y_ref_small = mlp_reference(x_small, params)
    assert y_small.shape == (16, out_size)
    assert jnp.allclose(y_small, y_ref_small, atol=1e-5, rtol=1e-5), \
        "small-batch mismatch vs JAX reference"

    # Larger, non-multiple batch: exercises padding + multiple lane-dense tiles.
    key, kx2 = jax.random.split(key)
    x_big = jax.random.normal(kx2, (300, input_size), dtype=jnp.float32)
    y_big = jax.block_until_ready(
        mlp_unit_forward(x_big, params, batch_tile=128))
    y_ref_big = mlp_reference(x_big, params)
    assert y_big.shape == (300, out_size)
    assert jnp.allclose(y_big, y_ref_big, atol=1e-5, rtol=1e-5), \
        "big-batch mismatch vs JAX reference"

    # bf16 MXU-operand path (v6e/v7x recommendation); f32 accumulation keeps
    # the error small but the tolerance is necessarily looser.
    y_bf16 = jax.block_until_ready(
        mlp_unit_forward(x_big, params, batch_tile=128,
                         compute_dtype=jnp.bfloat16))
    assert jnp.allclose(y_bf16, y_ref_big, atol=5e-2, rtol=5e-2), \
        "bf16 path mismatch vs f32 reference"

    print("KERNEL_OK")
</pallas_src>

<mosaic_0001>
module attributes {stable_mosaic.version = 11 : i64} {
  func.func @_mlp_kernel(%arg0: i32, %arg1: memref<32x16xf32, #tpu.memory_space<vmem>>, %arg2: memref<64x32xf32, #tpu.memory_space<vmem>>, %arg3: memref<64x1xf32, #tpu.memory_space<vmem>>, %arg4: memref<48x64xf32, #tpu.memory_space<vmem>>, %arg5: memref<48x1xf32, #tpu.memory_space<vmem>>, %arg6: memref<32x48xf32, #tpu.memory_space<vmem>>, %arg7: memref<32x1xf32, #tpu.memory_space<vmem>>, %arg8: memref<16x32xf32, #tpu.memory_space<vmem>>, %arg9: memref<16x1xf32, #tpu.memory_space<vmem>>, %arg10: memref<16x16xf32, #tpu.memory_space<vmem>>) attributes {dimension_semantics = [#tpu.dimension_semantics<parallel>], iteration_bounds = array<i64: 1>, scalar_prefetch = 0 : i64, scratch_operands = 0 : i64, tpu.core_type = #tpu.core_type<tc>, window_params = [{transform_indices = @transform_0, window_bounds = array<i64: 32, 16>}, {pipeline_mode = #tpu.pipeline_mode<synchronous>, transform_indices = @transform_1, window_bounds = array<i64: 64, 32>}, {pipeline_mode = #tpu.pipeline_mode<synchronous>, transform_indices = @transform_2, window_bounds = array<i64: 64, 1>}, {pipeline_mode = #tpu.pipeline_mode<synchronous>, transform_indices = @transform_3, window_bounds = array<i64: 48, 64>}, {pipeline_mode = #tpu.pipeline_mode<synchronous>, transform_indices = @transform_4, window_bounds = array<i64: 48, 1>}, {pipeline_mode = #tpu.pipeline_mode<synchronous>, transform_indices = @transform_5, window_bounds = array<i64: 32, 48>}, {pipeline_mode = #tpu.pipeline_mode<synchronous>, transform_indices = @transform_6, window_bounds = array<i64: 32, 1>}, {pipeline_mode = #tpu.pipeline_mode<synchronous>, transform_indices = @transform_7, window_bounds = array<i64: 16, 32>}, {pipeline_mode = #tpu.pipeline_mode<synchronous>, transform_indices = @transform_8, window_bounds = array<i64: 16, 1>}, {transform_indices = @transform_9, window_bounds = array<i64: 16, 16>}]} {
    %c0 = arith.constant 0 : index
    %c0_0 = arith.constant 0 : index
    %0 = vector.load %arg1[%c0, %c0_0] : memref<32x16xf32, #tpu.memory_space<vmem>>, vector<32x16xf32>
    %c0_1 = arith.constant 0 : index
    %c0_2 = arith.constant 0 : index
    %1 = vector.load %arg2[%c0_1, %c0_2] : memref<64x32xf32, #tpu.memory_space<vmem>>, vector<64x32xf32>
    %cst = arith.constant dense<0.000000e+00> : vector<64x16xf32>
    %2 = tpu.matmul %1, %0, %cst {dimension_numbers = #tpu.dot_dimension_numbers<[1], [0], [0], [1], [0, 0, 1, 1], [], []>} : vector<64x32xf32>, vector<32x16xf32>, vector<64x16xf32> -> vector<64x16xf32>
    %c0_3 = arith.constant 0 : index
    %c0_4 = arith.constant 0 : index
    %3 = vector.load %arg3[%c0_3, %c0_4] : memref<64x1xf32, #tpu.memory_space<vmem>>, vector<64x1xf32>
    %4 = vector.broadcast %3 : vector<64x1xf32> to vector<64x16xf32>
    %5 = arith.addf %2, %4 : vector<64x16xf32>
    %6 = math.tanh %5 : vector<64x16xf32>
    %c0_5 = arith.constant 0 : index
    %c0_6 = arith.constant 0 : index
    %7 = vector.load %arg4[%c0_5, %c0_6] : memref<48x64xf32, #tpu.memory_space<vmem>>, vector<48x64xf32>
    %cst_7 = arith.constant dense<0.000000e+00> : vector<48x16xf32>
    %8 = tpu.matmul %7, %6, %cst_7 {dimension_numbers = #tpu.dot_dimension_numbers<[1], [0], [0], [1], [0, 0, 1, 1], [], []>} : vector<48x64xf32>, vector<64x16xf32>, vector<48x16xf32> -> vector<48x16xf32>
    %c0_8 = arith.constant 0 : index
    %c0_9 = arith.constant 0 : index
    %9 = vector.load %arg5[%c0_8, %c0_9] : memref<48x1xf32, #tpu.memory_space<vmem>>, vector<48x1xf32>
    %10 = vector.broadcast %9 : vector<48x1xf32> to vector<48x16xf32>
    %11 = arith.addf %8, %10 : vector<48x16xf32>
    %12 = math.tanh %11 : vector<48x16xf32>
    %c0_10 = arith.constant 0 : index
    %c0_11 = arith.constant 0 : index
    %13 = vector.load %arg6[%c0_10, %c0_11] : memref<32x48xf32, #tpu.memory_space<vmem>>, vector<32x48xf32>
    %cst_12 = arith.constant dense<0.000000e+00> : vector<32x16xf32>
    %14 = tpu.matmul %13, %12, %cst_12 {dimension_numbers = #tpu.dot_dimension_numbers<[1], [0], [0], [1], [0, 0, 1, 1], [], []>} : vector<32x48xf32>, vector<48x16xf32>, vector<32x16xf32> -> vector<32x16xf32>
    %c0_13 = arith.constant 0 : index
    %c0_14 = arith.constant 0 : index
    %15 = vector.load %arg7[%c0_13, %c0_14] : memref<32x1xf32, #tpu.memory_space<vmem>>, vector<32x1xf32>
    %16 = vector.broadcast %15 : vector<32x1xf32> to vector<32x16xf32>
    %17 = arith.addf %14, %16 : vector<32x16xf32>
    %18 = math.tanh %17 : vector<32x16xf32>
    %c0_15 = arith.constant 0 : index
    %c0_16 = arith.constant 0 : index
    %19 = vector.load %arg8[%c0_15, %c0_16] : memref<16x32xf32, #tpu.memory_space<vmem>>, vector<16x32xf32>
    %cst_17 = arith.constant dense<0.000000e+00> : vector<16x16xf32>
    %20 = tpu.matmul %19, %18, %cst_17 {dimension_numbers = #tpu.dot_dimension_numbers<[1], [0], [0], [1], [0, 0, 1, 1], [], []>} : vector<16x32xf32>, vector<32x16xf32>, vector<16x16xf32> -> vector<16x16xf32>
    %c0_18 = arith.constant 0 : index
    %c0_19 = arith.constant 0 : index
    %21 = vector.load %arg9[%c0_18, %c0_19] : memref<16x1xf32, #tpu.memory_space<vmem>>, vector<16x1xf32>
    %22 = vector.broadcast %21 : vector<16x1xf32> to vector<16x16xf32>
    %23 = arith.addf %20, %22 : vector<16x16xf32>
    %c0_20 = arith.constant 0 : index
    %c0_21 = arith.constant 0 : index
    %24 = vector.load %arg10[%c0_20, %c0_21] : memref<16x16xf32, #tpu.memory_space<vmem>>, vector<16x16xf32>
    tpu.vector_store %arg10[%c0_20, %c0_21], %23 {strides = array<i32>} : memref<16x16xf32, #tpu.memory_space<vmem>>, vector<16x16xf32>,
    return
  }
  func.func @transform_0(%arg0: i32) -> (i32, i32) {
    %c0_i32 = arith.constant 0 : i32
    %c0_i32_0 = arith.constant 0 : i32
    return %c0_i32, %arg0 : i32, i32
  }
  func.func @transform_1(%arg0: i32) -> (i32, i32) {
    %c0_i32 = arith.constant 0 : i32
    %c0_i32_0 = arith.constant 0 : i32
    %c0_i32_1 = arith.constant 0 : i32
    return %c0_i32, %c0_i32_0 : i32, i32
  }
  func.func @transform_2(%arg0: i32) -> (i32, i32) {
    %c0_i32 = arith.constant 0 : i32
    %c0_i32_0 = arith.constant 0 : i32
    %c0_i32_1 = arith.constant 0 : i32
    return %c0_i32, %c0_i32_0 : i32, i32
  }
  func.func @transform_3(%arg0: i32) -> (i32, i32) {
    %c0_i32 = arith.constant 0 : i32
    %c0_i32_0 = arith.constant 0 : i32
    %c0_i32_1 = arith.constant 0 : i32
    return %c0_i32, %c0_i32_0 : i32, i32
  }
  func.func @transform_4(%arg0: i32) -> (i32, i32) {
    %c0_i32 = arith.constant 0 : i32
    %c0_i32_0 = arith.constant 0 : i32
    %c0_i32_1 = arith.constant 0 : i32
    return %c0_i32, %c0_i32_0 : i32, i32
  }
  func.func @transform_5(%arg0: i32) -> (i32, i32) {
    %c0_i32 = arith.constant 0 : i32
    %c0_i32_0 = arith.constant 0 : i32
    %c0_i32_1 = arith.constant 0 : i32
    return %c0_i32, %c0_i32_0 : i32, i32
  }
  func.func @transform_6(%arg0: i32) -> (i32, i32) {
    %c0_i32 = arith.constant 0 : i32
    %c0_i32_0 = arith.constant 0 : i32
    %c0_i32_1 = arith.constant 0 : i32
    return %c0_i32, %c0_i32_0 : i32, i32
  }
  func.func @transform_7(%arg0: i32) -> (i32, i32) {
    %c0_i32 = arith.constant 0 : i32
    %c0_i32_0 = arith.constant 0 : i32
    %c0_i32_1 = arith.constant 0 : i32
    return %c0_i32, %c0_i32_0 : i32, i32
  }
  func.func @transform_8(%arg0: i32) -> (i32, i32) {
    %c0_i32 = arith.constant 0 : i32
    %c0_i32_0 = arith.constant 0 : i32
    %c0_i32_1 = arith.constant 0 : i32
    return %c0_i32, %c0_i32_0 : i32, i32
  }
  func.func @transform_9(%arg0: i32) -> (i32, i32) {
    %c0_i32 = arith.constant 0 : i32
    %c0_i32_0 = arith.constant 0 : i32
    return %c0_i32, %arg0 : i32, i32
  }
}

</mosaic_0001>

<llo_original>
// kernel: mlp_unit_forward.1
$region0: #{mlp_unit_forward.1}
  #allocation0 [shape = 'u32[]', space=smem, size = 0x4, offset = 0x4, fixed_abs, tag = 'smem constant byte address 0x4 - core index']
  #allocation1 [shape = 'u32[144,128]{1,0:T(1,128)}', space=vmem, size = 0x12000, scoped, tag = 'internal scratch']
  %s0 = inlined_call_operand.vmem [shape: f32[32,16], index: 0, kind: input, shape index: {}]
  %s1 = inlined_call_operand.vmem [shape: f32[64,32], index: 1, kind: input, shape index: {}]
  %s2 = inlined_call_operand.vmem [shape: f32[64,1], index: 2, kind: input, shape index: {}]
  %s3 = inlined_call_operand.vmem [shape: f32[48,64], index: 3, kind: input, shape index: {}]
  %s4 = inlined_call_operand.vmem [shape: f32[48,1], index: 4, kind: input, shape index: {}]
  %s5 = inlined_call_operand.vmem [shape: f32[32,48], index: 5, kind: input, shape index: {}]
  %s6 = inlined_call_operand.vmem [shape: f32[32,1], index: 6, kind: input, shape index: {}]
  %s7 = inlined_call_operand.vmem [shape: f32[16,32], index: 7, kind: input, shape index: {}]
  %s8 = inlined_call_operand.vmem [shape: f32[16,1], index: 8, kind: input, shape index: {}]
  %s9 = inlined_call_operand.vmem [shape: f32[16,16], index: 9, kind: output, shape index: {}]
  %s10 = sld [smem:[#allocation0]]
  $region46: #{mlp_unit_forward.1} parent=0
    _
  %s12 = ssub.s32 1, %s10
  %s13 = scalar_select 0, %s12, %s10
  // Predicated region
  $region2: #{mlp_unit_forward.1} parent=0 // pred_check
    _
  $region3: #{mlp_unit_forward.1} parent=0 // pred_check_branch
    %15 = sbr.rel (0) target = $region5
  $region4: #{mlp_unit_forward.1} parent=0 // pred_region
    _
  $region5: #{mlp_unit_forward.1} parent=0 // pred_fallthru
    _
  // Predicated region
  $region6: #{mlp_unit_forward.1} parent=0 // pred_check
    _
  $region7: #{mlp_unit_forward.1} parent=0 // pred_check_branch
    %17 = sbr.rel (0) target = $region9
  $region8: #{mlp_unit_forward.1} parent=0 // pred_region
    _
  $region9: #{mlp_unit_forward.1} parent=0 // pred_fallthru
    _
  // Predicated region
  $region10: #{mlp_unit_forward.1} parent=0 // pred_check
    _
  $region11: #{mlp_unit_forward.1} parent=0 // pred_check_branch
    %19 = sbr.rel (0) target = $region13
  $region12: #{mlp_unit_forward.1} parent=0 // pred_region
    _
  $region13: #{mlp_unit_forward.1} parent=0 // pred_fallthru
    _
  // Predicated region
  $region14: #{mlp_unit_forward.1} parent=0 // pred_check
    _
  $region15: #{mlp_unit_forward.1} parent=0 // pred_check_branch
    %21 = sbr.rel (0) target = $region17
  $region16: #{mlp_unit_forward.1} parent=0 // pred_region
    _
  $region17: #{mlp_unit_forward.1} parent=0 // pred_fallthru
    _
  // Predicated region
  $region18: #{mlp_unit_forward.1} parent=0 // pred_check
    _
  $region19: #{mlp_unit_forward.1} parent=0 // pred_check_branch
    %23 = sbr.rel (0) target = $region21
  $region20: #{mlp_unit_forward.1} parent=0 // pred_region
    _
  $region21: #{mlp_unit_forward.1} parent=0 // pred_fallthru
    _
  // Predicated region
  $region22: #{mlp_unit_forward.1} parent=0 // pred_check
    _
  $region23: #{mlp_unit_forward.1} parent=0 // pred_check_branch
    %25 = sbr.rel (0) target = $region25
  $region24: #{mlp_unit_forward.1} parent=0 // pred_region
    _
  $region25: #{mlp_unit_forward.1} parent=0 // pred_fallthru
    _
  // Predicated region
  $region26: #{mlp_unit_forward.1} parent=0 // pred_check
    _
  $region27: #{mlp_unit_forward.1} parent=0 // pred_check_branch
    %27 = sbr.rel (0) target = $region29
  $region28: #{mlp_unit_forward.1} parent=0 // pred_region
    _
  $region29: #{mlp_unit_forward.1} parent=0 // pred_fallthru
    _
  // Predicated region
  $region30: #{mlp_unit_forward.1} parent=0 // pred_check
    _
  $region31: #{mlp_unit_forward.1} parent=0 // pred_check_branch
    %29 = sbr.rel (0) target = $region33
  $region32: #{mlp_unit_forward.1} parent=0 // pred_region
    _
  $region33: #{mlp_unit_forward.1} parent=0 // pred_fallthru
    _
  // Predicated region
  $region34: #{mlp_unit_forward.1} parent=0 // pred_check
    _
  $region35: #{mlp_unit_forward.1} parent=0 // pred_check_branch
    %31 = sbr.rel (0) target = $region37
  $region36: #{mlp_unit_forward.1} parent=0 // pred_region
    _
  $region37: #{mlp_unit_forward.1} parent=0 // pred_fallthru
    _
  %v32 = vld [vmem:[%s0] sm:$0xff]
  %v33 = vld [vmem:[%s0 + $0x8] sm:$0xff]
  %v34 = vld [vmem:[%s0 + $0x10] sm:$0xff]
  %v35 = vld [vmem:[%s0 + $0x18] sm:$0xff]
  %v36 = vld [vmem:[%s1] sm:$0xff]
  %v37 = vld [vmem:[%s1 + $0x8] sm:$0xff]
  %v38 = vld [vmem:[%s1 + $0x10] sm:$0xff]
  %v39 = vld [vmem:[%s1 + $0x18] sm:$0xff]
  %v40 = vld [vmem:[%s1 + $0x20] sm:$0xff]
  %v41 = vld [vmem:[%s1 + $0x28] sm:$0xff]
  %v42 = vld [vmem:[%s1 + $0x30] sm:$0xff]
  %v43 = vld [vmem:[%s1 + $0x38] sm:$0xff]
  %v44 = vld [vmem:[%s2] sm:$0xff]
  %v45 = vld [vmem:[%s2 + $0x8] sm:$0xff]
  %v46 = vld [vmem:[%s2 + $0x10] sm:$0xff]
  %v47 = vld [vmem:[%s2 + $0x18] sm:$0xff]
  %v48 = vld [vmem:[%s2 + $0x20] sm:$0xff]
  %v49 = vld [vmem:[%s2 + $0x28] sm:$0xff]
  %v50 = vld [vmem:[%s2 + $0x30] sm:$0xff]
  %v51 = vld [vmem:[%s2 + $0x38] sm:$0xff]
  %53 = vset.pattern.permute.xlu0 0
  %54 = vperm.xlu0 %53, %v44
  %v55 = vpop.permute.xlu0 %54
  %58 = vset.pattern.permute.xlu0 0
  %59 = vperm.xlu0 %58, %v45
  %v60 = vpop.permute.xlu0 %59
  %63 = vset.pattern.permute.xlu0 0
  %64 = vperm.xlu0 %63, %v46
  %v65 = vpop.permute.xlu0 %64
  %68 = vset.pattern.permute.xlu0 0
  %69 = vperm.xlu0 %68, %v47
  %v70 = vpop.permute.xlu0 %69
  %73 = vset.pattern.permute.xlu0 0
  %74 = vperm.xlu0 %73, %v48
  %v75 = vpop.permute.xlu0 %74
  %78 = vset.pattern.permute.xlu0 0
  %79 = vperm.xlu0 %78, %v49
  %v80 = vpop.permute.xlu0 %79
  %83 = vset.pattern.permute.xlu0 0
  %84 = vperm.xlu0 %83, %v50
  %v85 = vpop.permute.xlu0 %84
  %88 = vset.pattern.permute.xlu0 0
  %89 = vperm.xlu0 %88, %v51
  %v90 = vpop.permute.xlu0 %89
  %vm92 = vcmask 261120
  %v94 = vsel %vm92, %v36, 0
  %v97 = vsel %vm92, %v37, 0
  %v100 = vsel %vm92, %v38, 0
  %v103 = vsel %vm92, %v39, 0
  %v106 = vsel %vm92, %v40, 0
  %v109 = vsel %vm92, %v41, 0
  %v112 = vsel %vm92, %v42, 0
  %v115 = vsel %vm92, %v43, 0
  %117 = vmatprep.subr.mxu0 0.0
  %118 = vmatpush1.msra.mxu0 %v32
  %119 = vmatprep.subr.mxu0 0.0
  %120 = vmatpush1.msra.mxu0 %v33
  %121 = vmatprep.subr.mxu0 0.0
  %122 = vmatpush1.msra.mxu0 %v34
  %123 = vmatprep.subr.mxu0 0.0
  %124 = vmatpush1.msra.mxu0 %v35
  %125 = vmatprep.subr.mxu0 0.0
  %126 = vmatpush1.msra.mxu0 0.0
  %127 = vmatprep.subr.mxu0 0.0
  %128 = vmatpush1.msra.mxu0 0.0
  %129 = vmatprep.subr.mxu0 0.0
  %130 = vmatpush1.msra.mxu0 0.0
  %131 = vmatprep.subr.mxu0 0.0
  %132 = vmatpush1.msra.mxu0 0.0
  %133 = vmatprep.subr.mxu0 0.0
  %134 = vmatpush1.msra.mxu0 0.0
  %135 = vmatprep.subr.mxu0 0.0
  %136 = vmatpush1.msra.mxu0 0.0
  %137 = vmatprep.subr.mxu0 0.0
  %138 = vmatpush1.msra.mxu0 0.0
  %139 = vmatprep.subr.mxu0 0.0
  %140 = vmatpush1.msra.mxu0 0.0
  %141 = vmatprep.subr.mxu0 0.0
  %142 = vmatpush1.msra.mxu0 0.0
  %143 = vmatprep.subr.mxu0 0.0
  %144 = vmatpush1.msra.mxu0 0.0
  %145 = vmatprep.subr.mxu0 0.0
  %146 = vmatpush1.msra.mxu0 0.0
  %147 = vmatprep.subr.mxu0 0.0
  %148 = vmatpush1.msra.mxu0 0.0
  %149 = vmatprep.subr.mxu0 0.0
  %150 = vmatpush1.msra.mxu0 0.0
  %151 = vmatprep.subr.mxu0 0.0
  %152 = vmatpush1.msra.mxu0 0.0
  %153 = vmatprep.subr.mxu0 0.0
  %154 = vmatpush1.msra.mxu0 0.0
  %155 = vmatprep.subr.mxu0 0.0
  %156 = vmatpush1.msra.mxu0 0.0
  %157 = vmatprep.subr.mxu0 0.0
  %158 = vmatpush1.msra.mxu0 0.0
  %159 = vmatprep.subr.mxu0 0.0
  %160 = vmatpush1.msra.mxu0 0.0
  %161 = vmatprep.subr.mxu0 0.0
  %162 = vmatpush1.msra.mxu0 0.0
  %163 = vmatprep.subr.mxu0 0.0
  %164 = vmatpush1.msra.mxu0 0.0
  %165 = vmatprep.subr.mxu0 0.0
  %166 = vmatpush1.msra.mxu0 0.0
  %167 = vmatprep.subr.mxu0 0.0
  %168 = vmatpush1.msra.mxu0 0.0
  %169 = vmatprep.subr.mxu0 0.0
  %170 = vmatpush1.msra.mxu0 0.0
  %171 = vmatprep.subr.mxu0 0.0
  %172 = vmatpush1.msra.mxu0 0.0
  %173 = vmatprep.subr.mxu0 0.0
  %174 = vmatpush1.msra.mxu0 0.0
  %175 = vmatprep.subr.mxu0 0.0
  %176 = vmatpush1.msra.mxu0 0.0
  %177 = vmatprep.subr.mxu0 0.0
  %178 = vmatpush1.msra.mxu0 0.0
  %179 = vmatprep.subr.mxu0 0.0
  %180 = vmatpush1.msra.mxu0 0.0
  %181 = vmatprep.mubr.f32.mxu0 0.0
  %182 = vmatmul.mubr.f32.gmra.mrb[0].mxu0 %v94
  %v183 = vpop.f32.mrb[0].mxu0
  %v184 = vadd.f32 %v55, %v183
  %v185 = vpop.f32.mrb[0].mxu0
  %186 = vmatprep.mubr.f32.mxu0 0.0
  %187 = vmatmul.mubr.f32.gmra.mrb[0].mxu0 %v97
  %v188 = vpop.f32.mrb[0].mxu0
  %v189 = vadd.f32 %v60, %v188
  %v190 = vpop.f32.mrb[0].mxu0
  %191 = vmatprep.mubr.f32.mxu0 0.0
  %192 = vmatmul.mubr.f32.gmra.mrb[0].mxu0 %v100
  %v193 = vpop.f32.mrb[0].mxu0
  %v194 = vadd.f32 %v65, %v193
  %v195 = vpop.f32.mrb[0].mxu0
  %196 = vmatprep.mubr.f32.mxu0 0.0
  %197 = vmatmul.mubr.f32.gmra.mrb[0].mxu0 %v103
  %v198 = vpop.f32.mrb[0].mxu0
  %v199 = vadd.f32 %v70, %v198
  %v200 = vpop.f32.mrb[0].mxu0
  %201 = vmatprep.mubr.f32.mxu0 0.0
  %202 = vmatmul.mubr.f32.gmra.mrb[0].mxu0 %v106
  %v203 = vpop.f32.mrb[0].mxu0
  %v204 = vadd.f32 %v75, %v203
  %v205 = vpop.f32.mrb[0].mxu0
  %206 = vmatprep.mubr.f32.mxu0 0.0
  %207 = vmatmul.mubr.f32.gmra.mrb[0].mxu0 %v109
  %v208 = vpop.f32.mrb[0].mxu0
  %v209 = vadd.f32 %v80, %v208
  %v210 = vpop.f32.mrb[0].mxu0
  %211 = vmatprep.mubr.f32.mxu0 0.0
  %212 = vmatmul.mubr.f32.gmra.mrb[0].mxu0 %v112
  %v213 = vpop.f32.mrb[0].mxu0
  %v214 = vadd.f32 %v85, %v213
  %v215 = vpop.f32.mrb[0].mxu0
  %216 = vmatprep.mubr.f32.mxu0 0.0
  %217 = vmatmul.mubr.f32.gmra.mrb[0].mxu0 %v115
  %v218 = vpop.f32.mrb[0].mxu0
  %v219 = vadd.f32 %v90, %v218
  %v220 = vpop.f32.mrb[0].mxu0
  %221 = vdwg.mxu0
  %v222 = vtanh.pop %v184
  %v223 = vtanh.pop %v189
  %v224 = vtanh.pop %v194
  %v225 = vtanh.pop %v199
  %v226 = vtanh.pop %v204
  %v227 = vtanh.pop %v209
  %v228 = vtanh.pop %v214
  %v229 = vtanh.pop %v219
  %v230 = vld [vmem:[%s3] sm:$0xff]
  %v231 = vld [vmem:[%s3 + $0x8] sm:$0xff]
  %v232 = vld [vmem:[%s3 + $0x10] sm:$0xff]
  %v233 = vld [vmem:[%s3 + $0x18] sm:$0xff]
  %v234 = vld [vmem:[%s3 + $0x20] sm:$0xff]
  %v235 = vld [vmem:[%s3 + $0x28] sm:$0xff]
  %v236 = vld [vmem:[%s4] sm:$0xff]
  %v237 = vld [vmem:[%s4 + $0x8] sm:$0xff]
  %v238 = vld [vmem:[%s4 + $0x10] sm:$0xff]
  %v239 = vld [vmem:[%s4 + $0x18] sm:$0xff]
  %v240 = vld [vmem:[%s4 + $0x20] sm:$0xff]
  %v241 = vld [vmem:[%s4 + $0x28] sm:$0xff]
  %243 = vset.pattern.permute.xlu0 0
  %244 = vperm.xlu0 %243, %v236
  %v245 = vpop.permute.xlu0 %244
  %248 = vset.pattern.permute.xlu0 0
  %249 = vperm.xlu0 %248, %v237
  %v250 = vpop.permute.xlu0 %249
  %253 = vset.pattern.permute.xlu0 0
  %254 = vperm.xlu0 %253, %v238
  %v255 = vpop.permute.xlu0 %254
  %258 = vset.pattern.permute.xlu0 0
  %259 = vperm.xlu0 %258, %v239
  %v260 = vpop.permute.xlu0 %259
  %263 = vset.pattern.permute.xlu0 0
  %264 = vperm.xlu0 %263, %v240
  %v265 = vpop.permute.xlu0 %264
  %268 = vset.pattern.permute.xlu0 0
  %269 = vperm.xlu0 %268, %v241
  %v270 = vpop.permute.xlu0 %269
  %vm272 = vcmask 523264
  %v274 = vsel %vm272, %v230, 0
  %v277 = vsel %vm272, %v231, 0
  %v280 = vsel %vm272, %v232, 0
  %v283 = vsel %vm272, %v233, 0
  %v286 = vsel %vm272, %v234, 0
  %v289 = vsel %vm272, %v235, 0
  %291 = vmatprep.subr.mxu0 0.0
  %292 = vmatpush1.msra.mxu0 %v222
  %293 = vmatprep.subr.mxu0 0.0
  %294 = vmatpush1.msra.mxu0 %v223
  %295 = vmatprep.subr.mxu0 0.0
  %296 = vmatpush1.msra.mxu0 %v224
  %297 = vmatprep.subr.mxu0 0.0
  %298 = vmatpush1.msra.mxu0 %v225
  %299 = vmatprep.subr.mxu0 0.0
  %300 = vmatpush1.msra.mxu0 %v226
  %301 = vmatprep.subr.mxu0 0.0
  %302 = vmatpush1.msra.mxu0 %v227
  %303 = vmatprep.subr.mxu0 0.0
  %304 = vmatpush1.msra.mxu0 %v228
  %305 = vmatprep.subr.mxu0 0.0
  %306 = vmatpush1.msra.mxu0 %v229
  %307 = vmatprep.subr.mxu0 0.0
  %308 = vmatpush1.msra.mxu0 0.0
  %309 = vmatprep.subr.mxu0 0.0
  %310 = vmatpush1.msra.mxu0 0.0
  %311 = vmatprep.subr.mxu0 0.0
  %312 = vmatpush1.msra.mxu0 0.0
  %313 = vmatprep.subr.mxu0 0.0
  %314 = vmatpush1.msra.mxu0 0.0
  %315 = vmatprep.subr.mxu0 0.0
  %316 = vmatpush1.msra.mxu0 0.0
  %317 = vmatprep.subr.mxu0 0.0
  %318 = vmatpush1.msra.mxu0 0.0
  %319 = vmatprep.subr.mxu0 0.0
  %320 = vmatpush1.msra.mxu0 0.0
  %321 = vmatprep.subr.mxu0 0.0
  %322 = vmatpush1.msra.mxu0 0.0
  %323 = vmatprep.subr.mxu0 0.0
  %324 = vmatpush1.msra.mxu0 0.0
  %325 = vmatprep.subr.mxu0 0.0
  %326 = vmatpush1.msra.mxu0 0.0
  %327 = vmatprep.subr.mxu0 0.0
  %328 = vmatpush1.msra.mxu0 0.0
  %329 = vmatprep.subr.mxu0 0.0
  %330 = vmatpush1.msra.mxu0 0.0
  %331 = vmatprep.subr.mxu0 0.0
  %332 = vmatpush1.msra.mxu0 0.0
  %333 = vmatprep.subr.mxu0 0.0
  %334 = vmatpush1.msra.mxu0 0.0
  %335 = vmatprep.subr.mxu0 0.0
  %336 = vmatpush1.msra.mxu0 0.0
  %337 = vmatprep.subr.mxu0 0.0
  %338 = vmatpush1.msra.mxu0 0.0
  %339 = vmatprep.subr.mxu0 0.0
  %340 = vmatpush1.msra.mxu0 0.0
  %341 = vmatprep.subr.mxu0 0.0
  %342 = vmatpush1.msra.mxu0 0.0
  %343 = vmatprep.subr.mxu0 0.0
  %344 = vmatpush1.msra.mxu0 0.0
  %345 = vmatprep.subr.mxu0 0.0
  %346 = vmatpush1.msra.mxu0 0.0
  %347 = vmatprep.subr.mxu0 0.0
  %348 = vmatpush1.msra.mxu0 0.0
  %349 = vmatprep.subr.mxu0 0.0
  %350 = vmatpush1.msra.mxu0 0.0
  %351 = vmatprep.subr.mxu0 0.0
  %352 = vmatpush1.msra.mxu0 0.0
  %353 = vmatprep.subr.mxu0 0.0
  %354 = vmatpush1.msra.mxu0 0.0
  %355 = vmatprep.mubr.f32.mxu0 0.0
  %356 = vmatmul.mubr.f32.gmra.mrb[0].mxu0 %v274
  %v357 = vpop.f32.mrb[0].mxu0
  %v358 = vadd.f32 %v245, %v357
  %v359 = vpop.f32.mrb[0].mxu0
  %360 = vmatprep.mubr.f32.mxu0 0.0
  %361 = vmatmul.mubr.f32.gmra.mrb[0].mxu0 %v277
  %v362 = vpop.f32.mrb[0].mxu0
  %v363 = vadd.f32 %v250, %v362
  %v364 = vpop.f32.mrb[0].mxu0
  %365 = vmatprep.mubr.f32.mxu0 0.0
  %366 = vmatmul.mubr.f32.gmra.mrb[0].mxu0 %v280
  %v367 = vpop.f32.mrb[0].mxu0
  %v368 = vadd.f32 %v255, %v367
  %v369 = vpop.f32.mrb[0].mxu0
  %370 = vmatprep.mubr.f32.mxu0 0.0
  %371 = vmatmul.mubr.f32.gmra.mrb[0].mxu0 %v283
  %v372 = vpop.f32.mrb[0].mxu0
  %v373 = vadd.f32 %v260, %v372
  %v374 = vpop.f32.mrb[0].mxu0
  %375 = vmatprep.mubr.f32.mxu0 0.0
  %376 = vmatmul.mubr.f32.gmra.mrb[0].mxu0 %v286
  %v377 = vpop.f32.mrb[0].mxu0
  %v378 = vadd.f32 %v265, %v377
  %v379 = vpop.f32.mrb[0].mxu0
  %380 = vmatprep.mubr.f32.mxu0 0.0
  %381 = vmatmul.mubr.f32.gmra.mrb[0].mxu0 %v289
  %v382 = vpop.f32.mrb[0].mxu0
  %v383 = vadd.f32 %v270, %v382
  %v384 = vpop.f32.mrb[0].mxu0
  %385 = vdwg.mxu0
  %v386 = vtanh.pop %v358
  %v387 = vtanh.pop %v363
  %v388 = vtanh.pop %v368
  %v389 = vtanh.pop %v373
  %v390 = vtanh.pop %v378
  %v391 = vtanh.pop %v383
  %v392 = vld [vmem:[%s5] sm:$0xff]
  %v393 = vld [vmem:[%s5 + $0x8] sm:$0xff]
  %v394 = vld [vmem:[%s5 + $0x10] sm:$0xff]
  %v395 = vld [vmem:[%s5 + $0x18] sm:$0xff]
  %v396 = vld [vmem:[%s6] sm:$0xff]
  %v397 = vld [vmem:[%s6 + $0x8] sm:$0xff]
  %v398 = vld [vmem:[%s6 + $0x10] sm:$0xff]
  %v399 = vld [vmem:[%s6 + $0x18] sm:$0xff]
  %401 = vset.pattern.permute.xlu0 0
  %402 = vperm.xlu0 %401, %v396
  %v403 = vpop.permute.xlu0 %402
  %406 = vset.pattern.permute.xlu0 0
  %407 = vperm.xlu0 %406, %v397
  %v408 = vpop.permute.xlu0 %407
  %411 = vset.pattern.permute.xlu0 0
  %412 = vperm.xlu0 %411, %v398
  %v413 = vpop.permute.xlu0 %412
  %416 = vset.pattern.permute.xlu0 0
  %417 = vperm.xlu0 %416, %v399
  %v418 = vpop.permute.xlu0 %417
  %vm420 = vcmask 392192
  %v422 = vsel %vm420, %v392, 0
  %v425 = vsel %vm420, %v393, 0
  %v428 = vsel %vm420, %v394, 0
  %v431 = vsel %vm420, %v395, 0
  %433 = vmatprep.subr.mxu0 0.0
  %434 = vmatpush1.msra.mxu0 %v386
  %435 = vmatprep.subr.mxu0 0.0
  %436 = vmatpush1.msra.mxu0 %v387
  %437 = vmatprep.subr.mxu0 0.0
  %438 = vmatpush1.msra.mxu0 %v388
  %439 = vmatprep.subr.mxu0 0.0
  %440 = vmatpush1.msra.mxu0 %v389
  %441 = vmatprep.subr.mxu0 0.0
  %442 = vmatpush1.msra.mxu0 %v390
  %443 = vmatprep.subr.mxu0 0.0
  %444 = vmatpush1.msra.mxu0 %v391
  %445 = vmatprep.subr.mxu0 0.0
  %446 = vmatpush1.msra.mxu0 0.0
  %447 = vmatprep.subr.mxu0 0.0
  %448 = vmatpush1.msra.mxu0 0.0
  %449 = vmatprep.subr.mxu0 0.0
  %450 = vmatpush1.msra.mxu0 0.0
  %451 = vmatprep.subr.mxu0 0.0
  %452 = vmatpush1.msra.mxu0 0.0
  %453 = vmatprep.subr.mxu0 0.0
  %454 = vmatpush1.msra.mxu0 0.0
  %455 = vmatprep.subr.mxu0 0.0
  %456 = vmatpush1.msra.mxu0 0.0
  %457 = vmatprep.subr.mxu0 0.0
  %458 = vmatpush1.msra.mxu0 0.0
  %459 = vmatprep.subr.mxu0 0.0
  %460 = vmatpush1.msra.mxu0 0.0
  %461 = vmatprep.subr.mxu0 0.0
  %462 = vmatpush1.msra.mxu0 0.0
  %463 = vmatprep.subr.mxu0 0.0
  %464 = vmatpush1.msra.mxu0 0.0
  %465 = vmatprep.subr.mxu0 0.0
  %466 = vmatpush1.msra.mxu0 0.0
  %467 = vmatprep.subr.mxu0 0.0
  %468 = vmatpush1.msra.mxu0 0.0
  %469 = vmatprep.subr.mxu0 0.0
  %470 = vmatpush1.msra.mxu0 0.0
  %471 = vmatprep.subr.mxu0 0.0
  %472 = vmatpush1.msra.mxu0 0.0
  %473 = vmatprep.subr.mxu0 0.0
  %474 = vmatpush1.msra.mxu0 0.0
  %475 = vmatprep.subr.mxu0 0.0
  %476 = vmatpush1.msra.mxu0 0.0
  %477 = vmatprep.subr.mxu0 0.0
  %478 = vmatpush1.msra.mxu0 0.0
  %479 = vmatprep.subr.mxu0 0.0
  %480 = vmatpush1.msra.mxu0 0.0
  %481 = vmatprep.subr.mxu0 0.0
  %482 = vmatpush1.msra.mxu0 0.0
  %483 = vmatprep.subr.mxu0 0.0
  %484 = vmatpush1.msra.mxu0 0.0
  %485 = vmatprep.subr.mxu0 0.0
  %486 = vmatpush1.msra.mxu0 0.0
  %487 = vmatprep.subr.mxu0 0.0
  %488 = vmatpush1.msra.mxu0 0.0
  %489 = vmatprep.subr.mxu0 0.0
  %490 = vmatpush1.msra.mxu0 0.0
  %491 = vmatprep.subr.mxu0 0.0
  %492 = vmatpush1.msra.mxu0 0.0
  %493 = vmatprep.subr.mxu0 0.0
  %494 = vmatpush1.msra.mxu0 0.0
  %495 = vmatprep.subr.mxu0 0.0
  %496 = vmatpush1.msra.mxu0 0.0
  %497 = vmatprep.mubr.f32.mxu0 0.0
  %498 = vmatmul.mubr.f32.gmra.mrb[0].mxu0 %v422
  %v499 = vpop.f32.mrb[0].mxu0
  %v500 = vadd.f32 %v403, %v499
  %v501 = vpop.f32.mrb[0].mxu0
  %502 = vmatprep.mubr.f32.mxu0 0.0
  %503 = vmatmul.mubr.f32.gmra.mrb[0].mxu0 %v425
  %v504 = vpop.f32.mrb[0].mxu0
  %v505 = vadd.f32 %v408, %v504
  %v506 = vpop.f32.mrb[0].mxu0
  %507 = vmatprep.mubr.f32.mxu0 0.0
  %508 = vmatmul.mubr.f32.gmra.mrb[0].mxu0 %v428
  %v509 = vpop.f32.mrb[0].mxu0
  %v510 = vadd.f32 %v413, %v509
  %v511 = vpop.f32.mrb[0].mxu0
  %512 = vmatprep.mubr.f32.mxu0 0.0
  %513 = vmatmul.mubr.f32.gmra.mrb[0].mxu0 %v431
  %v514 = vpop.f32.mrb[0].mxu0
  %v515 = vadd.f32 %v418, %v514
  %v516 = vpop.f32.mrb[0].mxu0
  %517 = vdwg.mxu0
  %v518 = vtanh.pop %v500
  %v519 = vtanh.pop %v505
  %v520 = vtanh.pop %v510
  %v521 = vtanh.pop %v515
  %v522 = vld [vmem:[%s7] sm:$0xff]
  %v523 = vld [vmem:[%s7 + $0x8] sm:$0xff]
  %v524 = vld [vmem:[%s8] sm:$0xff]
  %v525 = vld [vmem:[%s8 + $0x8] sm:$0xff]
  %527 = vset.pattern.permute.xlu0 0
  %528 = vperm.xlu0 %527, %v524
  %v529 = vpop.permute.xlu0 %528
  %532 = vset.pattern.permute.xlu0 0
  %533 = vperm.xlu0 %532, %v525
  %v534 = vpop.permute.xlu0 %533
  %v537 = vsel %vm92, %v522, 0
  %v540 = vsel %vm92, %v523, 0
  %542 = vmatprep.subr.mxu0 0.0
  %543 = vmatpush1.msra.mxu0 %v518
  %544 = vmatprep.subr.mxu0 0.0
  %545 = vmatpush1.msra.mxu0 %v519
  %546 = vmatprep.subr.mxu0 0.0
  %547 = vmatpush1.msra.mxu0 %v520
  %548 = vmatprep.subr.mxu0 0.0
  %549 = vmatpush1.msra.mxu0 %v521
  %550 = vmatprep.subr.mxu0 0.0
  %551 = vmatpush1.msra.mxu0 0.0
  %552 = vmatprep.subr.mxu0 0.0
  %553 = vmatpush1.msra.mxu0 0.0
  %554 = vmatprep.subr.mxu0 0.0
  %555 = vmatpush1.msra.mxu0 0.0
  %556 = vmatprep.subr.mxu0 0.0
  %557 = vmatpush1.msra.mxu0 0.0
  %558 = vmatprep.subr.mxu0 0.0
  %559 = vmatpush1.msra.mxu0 0.0
  %560 = vmatprep.subr.mxu0 0.0
  %561 = vmatpush1.msra.mxu0 0.0
  %562 = vmatprep.subr.mxu0 0.0
  %563 = vmatpush1.msra.mxu0 0.0
  %564 = vmatprep.subr.mxu0 0.0
  %565 = vmatpush1.msra.mxu0 0.0
  %566 = vmatprep.subr.mxu0 0.0
  %567 = vmatpush1.msra.mxu0 0.0
  %568 = vmatprep.subr.mxu0 0.0
  %569 = vmatpush1.msra.mxu0 0.0
  %570 = vmatprep.subr.mxu0 0.0
  %571 = vmatpush1.msra.mxu0 0.0
  %572 = vmatprep.subr.mxu0 0.0
  %573 = vmatpush1.msra.mxu0 0.0
  %574 = vmatprep.subr.mxu0 0.0
  %575 = vmatpush1.msra.mxu0 0.0
  %576 = vmatprep.subr.mxu0 0.0
  %577 = vmatpush1.msra.mxu0 0.0
  %578 = vmatprep.subr.mxu0 0.0
  %579 = vmatpush1.msra.mxu0 0.0
  %580 = vmatprep.subr.mxu0 0.0
  %581 = vmatpush1.msra.mxu0 0.0
  %582 = vmatprep.subr.mxu0 0.0
  %583 = vmatpush1.msra.mxu0 0.0
  %584 = vmatprep.subr.mxu0 0.0
  %585 = vmatpush1.msra.mxu0 0.0
  %586 = vmatprep.subr.mxu0 0.0
  %587 = vmatpush1.msra.mxu0 0.0
  %588 = vmatprep.subr.mxu0 0.0
  %589 = vmatpush1.msra.mxu0 0.0
  %590 = vmatprep.subr.mxu0 0.0
  %591 = vmatpush1.msra.mxu0 0.0
  %592 = vmatprep.subr.mxu0 0.0
  %593 = vmatpush1.msra.mxu0 0.0
  %594 = vmatprep.subr.mxu0 0.0
  %595 = vmatpush1.msra.mxu0 0.0
  %596 = vmatprep.subr.mxu0 0.0
  %597 = vmatpush1.msra.mxu0 0.0
  %598 = vmatprep.subr.mxu0 0.0
  %599 = vmatpush1.msra.mxu0 0.0
  %600 = vmatprep.subr.mxu0 0.0
  %601 = vmatpush1.msra.mxu0 0.0
  %602 = vmatprep.subr.mxu0 0.0
  %603 = vmatpush1.msra.mxu0 0.0
  %604 = vmatprep.subr.mxu0 0.0
  %605 = vmatpush1.msra.mxu0 0.0
  %606 = vmatprep.mubr.f32.mxu0 0.0
  %607 = vmatmul.mubr.f32.gmra.mrb[0].mxu0 %v537
  %v608 = vpop.f32.mrb[0].mxu0
  %v609 = vadd.f32 %v529, %v608
  %v610 = vpop.f32.mrb[0].mxu0
  %611 = vmatprep.mubr.f32.mxu0 0.0
  %612 = vmatmul.mubr.f32.gmra.mrb[0].mxu0 %v540
  %v613 = vpop.f32.mrb[0].mxu0
  %v614 = vadd.f32 %v534, %v613
  %v615 = vpop.f32.mrb[0].mxu0
  %616 = vdwg.mxu0
  %vm617 = vcmask 130048
  %618 = vst.msk [vmem:[%s9] sm:$0xff] %vm617, %v609
  %619 = vst.msk [vmem:[%s9 + $0x8] sm:$0xff] %vm617, %v614
  // Predicated region
  $region38: #{mlp_unit_forward.1} parent=0 // pred_check
    _
  $region39: #{mlp_unit_forward.1} parent=0 // pred_check_branch
    %621 = sbr.rel (0) target = $region41
  $region40: #{mlp_unit_forward.1} parent=0 // pred_region
    _
  $region41: #{mlp_unit_forward.1} parent=0 // pred_fallthru
    _
  // Predicated region
  $region42: #{mlp_unit_forward.1} parent=0 // pred_check
    _
  $region43: #{mlp_unit_forward.1} parent=0 // pred_check_branch
    %623 = sbr.rel (0) target = $region45
  $region44: #{mlp_unit_forward.1} parent=0 // pred_region
    _
  $region45: #{mlp_unit_forward.1} parent=0 // pred_fallthru
    _

</llo_original>
